<compile_context>
chip_gen: v6e
topology: v6e:2x2x1
jax: 0.10.0
libtpu: 0.0.40
codegen_flags: <defaults>
</compile_context>

<pallas_src>
import functools

import numpy as np
import jax
import jax.numpy as jnp
from jax.experimental import pallas as pl
from jax.experimental.pallas import tpu as pltpu


def _diffpool_kernel(f_out, h_ref, a_ref, wh_ref, wc_ref, b_ref,
                     adj_new_ref, h_new_ref):
    """One grid step == one graph of the batch."""
    h = h_ref[0]                               # (n_g, D_in)  f32
    A = a_ref[0].astype(jnp.float32)           # (n_g, n_g)   bf16 storage, f32 compute

    # --- MeanAggregator: c[i] = mean over in-neighbours of h ---------------------
    # (A block is already VMEM-resident, so the row-sum is a cheap local pass.)
    deg = jnp.sum(A, axis=1, keepdims=True)
    inv_deg = pl.reciprocal(jnp.maximum(deg, 1.0), approx=True)        # EUP
    c = inv_deg * jnp.dot(A, h, preferred_element_type=jnp.float32)

    # --- fused SAGE projections (feat | pool); concat(h,c) replaced by split W ---
    z = (jnp.dot(h, wh_ref[...], preferred_element_type=jnp.float32)
         + jnp.dot(c, wc_ref[...], preferred_element_type=jnp.float32)
         + b_ref[...])                          # (n_g, F_out + assign_dim)

    def norm_relu(x):                           # F.normalize(p=2, dim=1) then ReLU
        inv = jax.lax.rsqrt(jnp.maximum(jnp.sum(x * x, axis=1, keepdims=True), 1e-24))
        return jnp.maximum(x * inv, 0.0)

    feat = norm_relu(z[:, :f_out])              # (n_g, F_out)
    pool = norm_relu(z[:, f_out:])              # (n_g, assign_dim)

    # --- softmax over the assignment dim ------------------------------------------
    m = jnp.max(pool, axis=1, keepdims=True)
    e = jnp.exp(pool - m)
    s = e * pl.reciprocal(jnp.sum(e, axis=1, keepdims=True), approx=True)

    # --- per-graph pooling; contract dim 0 directly (no explicit transpose) -------
    dn = (((0,), (0,)), ((), ()))
    a_s = jnp.dot(A, s, preferred_element_type=jnp.float32)            # (n_g, assign)
    adj_new_ref[0] = jax.lax.dot_general(s, a_s, dn,
                                         preferred_element_type=jnp.float32)
    h_new_ref[0] = jax.lax.dot_general(s, feat, dn,
                                       preferred_element_type=jnp.float32)


def diffpool_forward(h, adj, num_graphs, w_feat, b_feat, w_pool, b_pool):
    n, d_in = h.shape
    assert n % num_graphs == 0, "equal-sized, graph-contiguous node ordering assumed"
    n_g = n // num_graphs
    assign_dim = w_pool.shape[1]
    f_out = w_feat.shape[1]
    f_tot = f_out + assign_dim

    # Per-graph views of node features and the diagonal adjacency blocks.
    h3 = h.reshape(num_graphs, n_g, d_in)
    idx = jnp.arange(num_graphs)
    adj_blocks = adj.reshape(num_graphs, n_g, num_graphs, n_g)[idx, :, idx, :]
    adj_blocks = adj_blocks.astype(jnp.bfloat16)        # 0/1 -> exact, halves DMA

    # Fuse feat_gc / pool_gc linears and split the concat(h, c) weight.
    w_all = jnp.concatenate([w_feat, w_pool], axis=1)   # (2*D_in, F_out+assign)
    w_top, w_bot = w_all[:d_in], w_all[d_in:]
    b_all = jnp.concatenate([b_feat, b_pool], axis=1)   # (1, F_out+assign)

    kernel = functools.partial(_diffpool_kernel, f_out)
    adj_new_blocks, h_new3 = pl.pallas_call(
        kernel,
        grid=(num_graphs,),
        in_specs=[
            pl.BlockSpec((1, n_g, d_in), lambda g: (g, 0, 0)),
            pl.BlockSpec((1, n_g, n_g), lambda g: (g, 0, 0)),
            pl.BlockSpec((d_in, f_tot), lambda g: (0, 0)),
            pl.BlockSpec((d_in, f_tot), lambda g: (0, 0)),
            pl.BlockSpec((1, f_tot), lambda g: (0, 0)),
        ],
        out_specs=(
            pl.BlockSpec((1, assign_dim, assign_dim), lambda g: (g, 0, 0)),
            pl.BlockSpec((1, assign_dim, f_out), lambda g: (g, 0, 0)),
        ),
        out_shape=(
            jax.ShapeDtypeStruct((num_graphs, assign_dim, assign_dim), jnp.float32),
            jax.ShapeDtypeStruct((num_graphs, assign_dim, f_out), jnp.float32),
        ),
        compiler_params=pltpu.CompilerParams(
            dimension_semantics=("parallel",),         # 2 TCs on v7x
            vmem_limit_bytes=32 * 1024 * 1024),        # explicit scoped-VMEM budget
    )(h3, adj_blocks, w_top, w_bot, b_all)

    # Assemble batched outputs: adj_new is block-diagonal, h_new stacks rows.
    adj_new = jax.scipy.linalg.block_diag(*adj_new_blocks)
    h_new = h_new3.reshape(num_graphs * assign_dim, f_out)
    return adj_new, h_new


def _reference(h, adj, batch_num_nodes, w_feat, b_feat, w_pool, b_pool):
    """Plain-JAX reference with the original (torch) math."""
    deg = jnp.sum(adj, axis=1, keepdims=True)
    c = (adj @ h) / jnp.maximum(deg, 1.0)
    hc = jnp.concatenate([h, c], axis=1)

    def sage(w, b):
        z = hc @ w + b
        z = z / jnp.maximum(jnp.linalg.norm(z, axis=1, keepdims=True), 1e-12)
        return jnp.maximum(z, 0.0)

    feat = sage(w_feat, b_feat)
    pool = sage(w_pool, b_pool)
    s = jax.nn.softmax(pool, axis=1)
    splits = list(np.cumsum(batch_num_nodes)[:-1])
    s_bd = jax.scipy.linalg.block_diag(*jnp.split(s, splits, axis=0))
    return s_bd.T @ (adj @ s_bd), s_bd.T @ feat


if __name__ == "__main__":
    # Small batched-graph setup: 2 graphs of 8 nodes each.
    num_graphs = 2
    nodes_per_graph = 8
    N = num_graphs * nodes_per_graph
    D_in = 32           # input_dim
    F_out = 32          # output_feat_dim
    assign_dim = 8      # assign_dim (clusters per graph block)

    key = jax.random.PRNGKey(0)
    k_h, k_wf, k_bf, k_wp, k_bp = jax.random.split(key, 5)

    h = jax.random.normal(k_h, (N, D_in), dtype=jnp.float32)

    # Block-diagonal symmetric ring adjacency (no cross-graph edges).
    adj_np = np.zeros((N, N), dtype=np.float32)
    for g in range(num_graphs):
        base = g * nodes_per_graph
        for i in range(nodes_per_graph):
            j = (i + 1) % nodes_per_graph
            adj_np[base + i, base + j] = 1.0
            adj_np[base + j, base + i] = 1.0
    adj = jnp.asarray(adj_np)

    def xavier(k, shape):
        fan_in, fan_out = shape
        scale = jnp.sqrt(2.0 / (fan_in + fan_out))
        return scale * jax.random.normal(k, shape, dtype=jnp.float32)

    # Bundler linear: in = 2*D_in (concat of h and aggregated c).
    w_feat = xavier(k_wf, (2 * D_in, F_out))
    b_feat = 0.01 * jax.random.normal(k_bf, (1, F_out), dtype=jnp.float32)
    w_pool = xavier(k_wp, (2 * D_in, assign_dim))
    b_pool = 0.01 * jax.random.normal(k_bp, (1, assign_dim), dtype=jnp.float32)

    adj_new, h_new = diffpool_forward(h, adj, num_graphs,
                                      w_feat, b_feat, w_pool, b_pool)
    jax.block_until_ready((adj_new, h_new))

    adj_ref, h_ref = _reference(h, adj, [nodes_per_graph] * num_graphs,
                                w_feat, b_feat, w_pool, b_pool)
    assert adj_new.shape == (num_graphs * assign_dim, num_graphs * assign_dim)
    assert h_new.shape == (num_graphs * assign_dim, F_out)
    assert jnp.allclose(adj_new, adj_ref, rtol=2e-3, atol=2e-3)
    assert jnp.allclose(h_new, h_ref, rtol=2e-3, atol=2e-3)

    print("KERNEL_OK")
</pallas_src>

<mosaic_0001>
module attributes {stable_mosaic.version = 11 : i64} {
  func.func @_diffpool_kernel(%arg0: i32, %arg1: memref<1x8x32xf32, #tpu.memory_space<vmem>>, %arg2: memref<1x8x8xbf16, #tpu.memory_space<vmem>>, %arg3: memref<32x40xf32, #tpu.memory_space<vmem>>, %arg4: memref<32x40xf32, #tpu.memory_space<vmem>>, %arg5: memref<1x40xf32, #tpu.memory_space<vmem>>, %arg6: memref<1x8x8xf32, #tpu.memory_space<vmem>>, %arg7: memref<1x8x32xf32, #tpu.memory_space<vmem>>) attributes {dimension_semantics = [#tpu.dimension_semantics<parallel>], iteration_bounds = array<i64: 2>, scalar_prefetch = 0 : i64, scratch_operands = 0 : i64, tpu.core_type = #tpu.core_type<tc>, window_params = [{transform_indices = @transform_0, window_bounds = array<i64: 1, 8, 32>}, {transform_indices = @transform_1, window_bounds = array<i64: 1, 8, 8>}, {pipeline_mode = #tpu.pipeline_mode<synchronous>, transform_indices = @transform_2, window_bounds = array<i64: 32, 40>}, {pipeline_mode = #tpu.pipeline_mode<synchronous>, transform_indices = @transform_3, window_bounds = array<i64: 32, 40>}, {pipeline_mode = #tpu.pipeline_mode<synchronous>, transform_indices = @transform_4, window_bounds = array<i64: 1, 40>}, {transform_indices = @transform_5, window_bounds = array<i64: 1, 8, 8>}, {transform_indices = @transform_6, window_bounds = array<i64: 1, 8, 32>}]} {
    %c0 = arith.constant 0 : index
    %c0_0 = arith.constant 0 : index
    %c0_1 = arith.constant 0 : index
    %0 = vector.load %arg1[%c0, %c0_0, %c0_1] : memref<1x8x32xf32, #tpu.memory_space<vmem>>, vector<1x8x32xf32>
    %1 = vector.shape_cast %0 : vector<1x8x32xf32> to vector<8x32xf32>
    %c0_2 = arith.constant 0 : index
    %c0_3 = arith.constant 0 : index
    %c0_4 = arith.constant 0 : index
    %2 = vector.load %arg2[%c0_2, %c0_3, %c0_4] : memref<1x8x8xbf16, #tpu.memory_space<vmem>>, vector<1x8x8xbf16>
    %3 = vector.shape_cast %2 : vector<1x8x8xbf16> to vector<8x8xbf16>
    %4 = arith.extf %3 : vector<8x8xbf16> to vector<8x8xf32>
    %cst = arith.constant dense<0.000000e+00> : vector<8xf32>
    %5 = vector.multi_reduction <add>, %4, %cst [1] : vector<8x8xf32> to vector<8xf32>
    %6 = vector.shape_cast %5 : vector<8xf32> to vector<8x1xf32>
    %cst_5 = arith.constant 1.000000e+00 : f32
    %7 = vector.broadcast %cst_5 : f32 to vector<8x1xf32>
    %8 = arith.maximumf %6, %7 : vector<8x1xf32>
    %9 = tpu.reciprocal %8 {approx = true} : vector<8x1xf32> -> vector<8x1xf32>
    %cst_6 = arith.constant dense<0.000000e+00> : vector<8x32xf32>
    %10 = tpu.matmul %4, %1, %cst_6 {dimension_numbers = #tpu.dot_dimension_numbers<[1], [0], [0], [1], [0, 0, 1, 1], [], []>} : vector<8x8xf32>, vector<8x32xf32>, vector<8x32xf32> -> vector<8x32xf32>
    %11 = vector.broadcast %9 : vector<8x1xf32> to vector<8x32xf32>
    %12 = arith.mulf %11, %10 : vector<8x32xf32>
    %c0_7 = arith.constant 0 : index
    %c0_8 = arith.constant 0 : index
    %13 = vector.load %arg3[%c0_7, %c0_8] : memref<32x40xf32, #tpu.memory_space<vmem>>, vector<32x40xf32>
    %cst_9 = arith.constant dense<0.000000e+00> : vector<8x40xf32>
    %14 = tpu.matmul %1, %13, %cst_9 {dimension_numbers = #tpu.dot_dimension_numbers<[1], [0], [0], [1], [0, 0, 1, 1], [], []>} : vector<8x32xf32>, vector<32x40xf32>, vector<8x40xf32> -> vector<8x40xf32>
    %c0_10 = arith.constant 0 : index
    %c0_11 = arith.constant 0 : index
    %15 = vector.load %arg4[%c0_10, %c0_11] : memref<32x40xf32, #tpu.memory_space<vmem>>, vector<32x40xf32>
    %cst_12 = arith.constant dense<0.000000e+00> : vector<8x40xf32>
    %16 = tpu.matmul %12, %15, %cst_12 {dimension_numbers = #tpu.dot_dimension_numbers<[1], [0], [0], [1], [0, 0, 1, 1], [], []>} : vector<8x32xf32>, vector<32x40xf32>, vector<8x40xf32> -> vector<8x40xf32>
    %17 = arith.addf %14, %16 : vector<8x40xf32>
    %c0_13 = arith.constant 0 : index
    %c0_14 = arith.constant 0 : index
    %18 = vector.load %arg5[%c0_13, %c0_14] : memref<1x40xf32, #tpu.memory_space<vmem>>, vector<1x40xf32>
    %19 = vector.broadcast %18 : vector<1x40xf32> to vector<8x40xf32>
    %20 = arith.addf %17, %19 : vector<8x40xf32>
    %21 = vector.extract_strided_slice %20 {offsets = [0, 0], sizes = [8, 32], strides = [1, 1]} : vector<8x40xf32> to vector<8x32xf32>
    %22 = arith.mulf %21, %21 : vector<8x32xf32>
    %cst_15 = arith.constant dense<0.000000e+00> : vector<8xf32>
    %23 = vector.multi_reduction <add>, %22, %cst_15 [1] : vector<8x32xf32> to vector<8xf32>
    %24 = vector.shape_cast %23 : vector<8xf32> to vector<8x1xf32>
    %cst_16 = arith.constant 1.000000e-24 : f32
    %25 = vector.broadcast %cst_16 : f32 to vector<8x1xf32>
    %26 = arith.maximumf %24, %25 : vector<8x1xf32>
    %27 = math.rsqrt %26 : vector<8x1xf32>
    %28 = vector.broadcast %27 : vector<8x1xf32> to vector<8x32xf32>
    %29 = arith.mulf %21, %28 : vector<8x32xf32>
    %cst_17 = arith.constant 0.000000e+00 : f32
    %30 = vector.broadcast %cst_17 : f32 to vector<8x32xf32>
    %31 = arith.maximumf %29, %30 : vector<8x32xf32>
    %32 = vector.extract_strided_slice %20 {offsets = [0, 32], sizes = [8, 8], strides = [1, 1]} : vector<8x40xf32> to vector<8x8xf32>
    %33 = arith.mulf %32, %32 : vector<8x8xf32>
    %cst_18 = arith.constant dense<0.000000e+00> : vector<8xf32>
    %34 = vector.multi_reduction <add>, %33, %cst_18 [1] : vector<8x8xf32> to vector<8xf32>
    %35 = vector.shape_cast %34 : vector<8xf32> to vector<8x1xf32>
    %cst_19 = arith.constant 1.000000e-24 : f32
    %36 = vector.broadcast %cst_19 : f32 to vector<8x1xf32>
    %37 = arith.maximumf %35, %36 : vector<8x1xf32>
    %38 = math.rsqrt %37 : vector<8x1xf32>
    %39 = vector.broadcast %38 : vector<8x1xf32> to vector<8x8xf32>
    %40 = arith.mulf %32, %39 : vector<8x8xf32>
    %cst_20 = arith.constant 0.000000e+00 : f32
    %41 = vector.broadcast %cst_20 : f32 to vector<8x8xf32>
    %42 = arith.maximumf %40, %41 : vector<8x8xf32>
    %cst_21 = arith.constant dense<0xFF800000> : vector<8xf32>
    %43 = vector.multi_reduction <maximumf>, %42, %cst_21 [1] : vector<8x8xf32> to vector<8xf32>
    %44 = vector.shape_cast %43 : vector<8xf32> to vector<8x1xf32>
    %45 = vector.broadcast %44 : vector<8x1xf32> to vector<8x8xf32>
    %46 = arith.subf %42, %45 : vector<8x8xf32>
    %47 = math.exp %46 : vector<8x8xf32>
    %cst_22 = arith.constant dense<0.000000e+00> : vector<8xf32>
    %48 = vector.multi_reduction <add>, %47, %cst_22 [1] : vector<8x8xf32> to vector<8xf32>
    %49 = vector.shape_cast %48 : vector<8xf32> to vector<8x1xf32>
    %50 = tpu.reciprocal %49 {approx = true} : vector<8x1xf32> -> vector<8x1xf32>
    %51 = vector.broadcast %50 : vector<8x1xf32> to vector<8x8xf32>
    %52 = arith.mulf %47, %51 : vector<8x8xf32>
    %cst_23 = arith.constant dense<0.000000e+00> : vector<8x8xf32>
    %53 = tpu.matmul %4, %52, %cst_23 {dimension_numbers = #tpu.dot_dimension_numbers<[1], [0], [0], [1], [0, 0, 1, 1], [], []>} : vector<8x8xf32>, vector<8x8xf32>, vector<8x8xf32> -> vector<8x8xf32>
    %cst_24 = arith.constant dense<0.000000e+00> : vector<8x8xf32>
    %54 = tpu.matmul %52, %53, %cst_24 {dimension_numbers = #tpu.dot_dimension_numbers<[0], [0], [1], [1], [0, 1, 1, 1], [], []>} : vector<8x8xf32>, vector<8x8xf32>, vector<8x8xf32> -> vector<8x8xf32>
    %c0_25 = arith.constant 0 : index
    %c0_26 = arith.constant 0 : index
    %c0_27 = arith.constant 0 : index
    %55 = vector.load %arg6[%c0_25, %c0_26, %c0_27] : memref<1x8x8xf32, #tpu.memory_space<vmem>>, vector<1x8x8xf32>
    %56 = vector.shape_cast %55 : vector<1x8x8xf32> to vector<8x8xf32>
    %57 = vector.shape_cast %54 : vector<8x8xf32> to vector<1x8x8xf32>
    tpu.vector_store %arg6[%c0_25, %c0_26, %c0_27], %57 {strides = array<i32>} : memref<1x8x8xf32, #tpu.memory_space<vmem>>, vector<1x8x8xf32>,
    %cst_28 = arith.constant dense<0.000000e+00> : vector<8x32xf32>
    %58 = tpu.matmul %52, %31, %cst_28 {dimension_numbers = #tpu.dot_dimension_numbers<[0], [0], [1], [1], [0, 1, 1, 1], [], []>} : vector<8x8xf32>, vector<8x32xf32>, vector<8x32xf32> -> vector<8x32xf32>
    %c0_29 = arith.constant 0 : index
    %c0_30 = arith.constant 0 : index
    %c0_31 = arith.constant 0 : index
    %59 = vector.load %arg7[%c0_29, %c0_30, %c0_31] : memref<1x8x32xf32, #tpu.memory_space<vmem>>, vector<1x8x32xf32>
    %60 = vector.shape_cast %59 : vector<1x8x32xf32> to vector<8x32xf32>
    %61 = vector.shape_cast %58 : vector<8x32xf32> to vector<1x8x32xf32>
    tpu.vector_store %arg7[%c0_29, %c0_30, %c0_31], %61 {strides = array<i32>} : memref<1x8x32xf32, #tpu.memory_space<vmem>>, vector<1x8x32xf32>,
    return
  }
  func.func @transform_0(%arg0: i32) -> (i32, i32, i32) {
    %c0_i32 = arith.constant 0 : i32
    %c0_i32_0 = arith.constant 0 : i32
    %c0_i32_1 = arith.constant 0 : i32
    return %arg0, %c0_i32, %c0_i32_0 : i32, i32, i32
  }
  func.func @transform_1(%arg0: i32) -> (i32, i32, i32) {
    %c0_i32 = arith.constant 0 : i32
    %c0_i32_0 = arith.constant 0 : i32
    %c0_i32_1 = arith.constant 0 : i32
    return %arg0, %c0_i32, %c0_i32_0 : i32, i32, i32
  }
  func.func @transform_2(%arg0: i32) -> (i32, i32) {
    %c0_i32 = arith.constant 0 : i32
    %c0_i32_0 = arith.constant 0 : i32
    %c0_i32_1 = arith.constant 0 : i32
    return %c0_i32, %c0_i32_0 : i32, i32
  }
  func.func @transform_3(%arg0: i32) -> (i32, i32) {
    %c0_i32 = arith.constant 0 : i32
    %c0_i32_0 = arith.constant 0 : i32
    %c0_i32_1 = arith.constant 0 : i32
    return %c0_i32, %c0_i32_0 : i32, i32
  }
  func.func @transform_4(%arg0: i32) -> (i32, i32) {
    %c0_i32 = arith.constant 0 : i32
    %c0_i32_0 = arith.constant 0 : i32
    %c0_i32_1 = arith.constant 0 : i32
    return %c0_i32, %c0_i32_0 : i32, i32
  }
  func.func @transform_5(%arg0: i32) -> (i32, i32, i32) {
    %c0_i32 = arith.constant 0 : i32
    %c0_i32_0 = arith.constant 0 : i32
    %c0_i32_1 = arith.constant 0 : i32
    return %arg0, %c0_i32, %c0_i32_0 : i32, i32, i32
  }
  func.func @transform_6(%arg0: i32) -> (i32, i32, i32) {
    %c0_i32 = arith.constant 0 : i32
    %c0_i32_0 = arith.constant 0 : i32
    %c0_i32_1 = arith.constant 0 : i32
    return %arg0, %c0_i32, %c0_i32_0 : i32, i32, i32
  }
}

</mosaic_0001>

<llo_original>
// kernel: tpu_custom_call.1
$region0: #{tpu_custom_call.1}
  #allocation0 [shape = 'u32[]', space=smem, size = 0x4, offset = 0x4, fixed_abs, tag = 'smem constant byte address 0x4 - core index']
  #allocation1 [shape = 'u32[144,128]{1,0:T(1,128)}', space=vmem, size = 0x12000, scoped, tag = 'internal scratch']
  %s0 = inlined_call_operand.hbm [shape: f32[2,8,32], index: 0, kind: input, shape index: {}]
  %s1 = inlined_call_operand.hbm [shape: bf16[2,8,8], index: 1, kind: input, shape index: {}]
  %s2 = inlined_call_operand.hbm [shape: f32[32,40], index: 2, kind: input, shape index: {}]
  %s3 = inlined_call_operand.hbm [shape: f32[32,40], index: 3, kind: input, shape index: {}]
  %s4 = inlined_call_operand.vmem [shape: f32[1,40], index: 4, kind: input, shape index: {}]
  %s5 = inlined_call_operand.hbm [shape: f32[2,8,8], index: 5, kind: output, shape index: {0}]
  %s6 = inlined_call_operand.hbm [shape: f32[2,8,32], index: 6, kind: output, shape index: {1}]
  %7 = xla_tuple %s5, %s6
  %s8 = sld [smem:[#allocation0]]
  $region77: #{tpu_custom_call.1} parent=0
    _
  %s10 = ssub.s32 1, %s8
  %s11 = scalar_select 0, %s10, %s8
  $region1: #{tpu_custom_call.1} parent=0
    #allocation2 [shape = 'u8[8192]{0}', space=vmem, size = 0x2000, scoped, tag = 'input window, operand 0']
    #allocation3 [shape = 's32[2]{0}', space=sflag, size = 0x8, scoped, tag = 'scoped memory for tpu_custom_call.1']
    #allocation4 [shape = 's32[2]{0}', space=sflag, size = 0x8, scoped, tag = 'scoped memory for tpu_custom_call.1']
    #allocation5 [shape = 'u8[4096]{0}', space=vmem, size = 0x1000, scoped, tag = 'input window, operand 1']
    #allocation6 [shape = 's32[2]{0}', space=sflag, size = 0x8, scoped, tag = 'scoped memory for tpu_custom_call.1']
    #allocation7 [shape = 'u8[16384]{0}', space=vmem, size = 0x4000, scoped, tag = 'input window, operand 2, single buffered']
    #allocation8 [shape = 'u8[16384]{0}', space=vmem, size = 0x4000, scoped, tag = 'input window, operand 3, single buffered']
    #allocation9 [shape = 's32[1]{0}', space=sflag, size = 0x4, scoped, tag = 'scoped memory for tpu_custom_call.1']
    #allocation10 [shape = 'u8[8192]{0}', space=vmem, size = 0x2000, scoped, tag = 'output window, operand 0']
    #allocation11 [shape = 'u8[8192]{0}', space=vmem, size = 0x2000, scoped, tag = 'output window, operand 1']
    #allocation12 [shape = 's32[2]{0}', space=sflag, size = 0x8, scoped, tag = 'scoped memory for tpu_custom_call.1']
    %12 = vsyncpa [#allocation3], 0
    %s13 = scalar_lea.sflag [#allocation3], 1
    %14 = vsyncpa %s13, 0
    %15 = vsyncpa [#allocation6], 0
    %s16 = scalar_lea.sflag [#allocation6], 1
    %17 = vsyncpa %s16, 0
    %18 = vsyncpa [#allocation9], 0
    %19 = vsyncpa [#allocation4], 0
    %s20 = scalar_lea.sflag [#allocation4], 1
    %21 = vsyncpa %s20, 0
    %22 = vsyncpa [#allocation12], 0
    %s23 = scalar_lea.sflag [#allocation12], 1
    %24 = vsyncpa %s23, 0
    loop: start=0, step=1, limit=4
    $region2: #{tpu_custom_call.1} parent=1 // loop_pre_header
      _
    $region3: #{tpu_custom_call.1} parent=1 // loop_header
      %s26 = sphi 0, %s30
      %p27 = scmp.ge.s32.totalorder %s26, 4
      %s36 = sphi 0, %s38
      %s39 = sphi 0, %s36
      %s40 = sphi 0, %s39
      %s56 = sphi 0, %s40
      %s62 = sphi 0, %s64
      %s65 = sphi 0, %s62
      %s66 = sphi 0, %s65
      %s82 = sphi 0, %s66
      %s86 = sphi 0, %s86
      %s88 = sphi 0, %s86
      %s89 = sphi 0, %s88
      %s103 = sphi 0, %s89
      %s107 = sphi 0, %s107
      %s109 = sphi 0, %s107
      %s110 = sphi 0, %s109
      %s124 = sphi 0, %s110
      %s128 = sphi 0, %s128
      %s130 = sphi 0, %s128
      %s131 = sphi 0, %s130
      %s145 = sphi 0, %s131
      %s151 = sphi 0, %s153
      %s154 = sphi 0, %s151
      %s155 = sphi 0, %s154
      %s171 = sphi 0, %s155
      %s177 = sphi 0, %s179
      %s180 = sphi 0, %s177
      %s181 = sphi 0, %s180
      %s197 = sphi 0, %s181
    $region4: #{tpu_custom_call.1} parent=1 // loop_header_branch
      %29 = sbr.rel (%p27) target = $region8
    $region5: #{tpu_custom_call.1} parent=1 // loop_body
      %s31 = ssub.s32 %s26, 1
      %s32 = ssub.s32 %s26, 2
      %s33 = sadd.s32 %s26, 1
      %s34 = ssub.s32 %s26, %s33
      %p35 = scmp.eq.s32.totalorder %s34, 0
      %s37 = sadd.s32 %s36, 1
      %s38 = scalar_select %p35, %s36, %s37
      %p41 = pneg %p35
      %p42 = scmp.eq.s32.totalorder %s26, 1
      %p43 = por %p41, %p42
      %p44 = scmp.ne.s32.totalorder %s36, %s39
      %p45 = scmp.eq.s32.totalorder %s26, 0
      %p46 = por %p44, %p45
      %p47 = scmp.ne.s32.totalorder %s36, %s39
      %p48 = scmp.eq.s32.totalorder %s31, 1
      %p49 = por %p47, %p48
      %p50 = scmp.ne.s32.totalorder %s39, %s40
      %p51 = scmp.eq.s32.totalorder %s31, 0
      %p52 = por %p50, %p51
      %p53 = scmp.ne.s32.totalorder %s39, %s40
      %p54 = scmp.eq.s32.totalorder %s32, 1
      %p55 = por %p53, %p54
      %p57 = scmp.ne.s32.totalorder %s40, %s56
      %p58 = scmp.eq.s32.totalorder %s32, 0
      %p59 = por %p57, %p58
      %s60 = ssub.s32 %s26, %s33
      %p61 = scmp.eq.s32.totalorder %s60, 0
      %s63 = sadd.s32 %s62, 1
      %s64 = scalar_select %p61, %s62, %s63
      %p67 = pneg %p61
      %p68 = scmp.eq.s32.totalorder %s26, 1
      %p69 = por %p67, %p68
      %p70 = scmp.ne.s32.totalorder %s62, %s65
      %p71 = scmp.eq.s32.totalorder %s26, 0
      %p72 = por %p70, %p71
      %p73 = scmp.ne.s32.totalorder %s62, %s65
      %p74 = scmp.eq.s32.totalorder %s31, 1
      %p75 = por %p73, %p74
      %p76 = scmp.ne.s32.totalorder %s65, %s66
      %p77 = scmp.eq.s32.totalorder %s31, 0
      %p78 = por %p76, %p77
      %p79 = scmp.ne.s32.totalorder %s65, %s66
      %p80 = scmp.eq.s32.totalorder %s32, 1
      %p81 = por %p79, %p80
      %p83 = scmp.ne.s32.totalorder %s66, %s82
      %p84 = scmp.eq.s32.totalorder %s32, 0
      %p85 = por %p83, %p84
      %s87 = sadd.s32 %s86, 1
      %p90 = scmp.eq.s32.totalorder %s26, 1
      %p91 = scmp.ne.s32.totalorder %s86, %s88
      %p92 = scmp.eq.s32.totalorder %s26, 0
      %p93 = por %p91, %p92
      %p94 = scmp.ne.s32.totalorder %s86, %s88
      %p95 = scmp.eq.s32.totalorder %s31, 1
      %p96 = por %p94, %p95
      %p97 = scmp.ne.s32.totalorder %s88, %s89
      %p98 = scmp.eq.s32.totalorder %s31, 0
      %p99 = por %p97, %p98
      %p100 = scmp.ne.s32.totalorder %s88, %s89
      %p101 = scmp.eq.s32.totalorder %s32, 1
      %p102 = por %p100, %p101
      %p104 = scmp.ne.s32.totalorder %s89, %s103
      %p105 = scmp.eq.s32.totalorder %s32, 0
      %p106 = por %p104, %p105
      %s108 = sadd.s32 %s107, 1
      %p111 = scmp.eq.s32.totalorder %s26, 1
      %p112 = scmp.ne.s32.totalorder %s107, %s109
      %p113 = scmp.eq.s32.totalorder %s26, 0
      %p114 = por %p112, %p113
      %p115 = scmp.ne.s32.totalorder %s107, %s109
      %p116 = scmp.eq.s32.totalorder %s31, 1
      %p117 = por %p115, %p116
      %p118 = scmp.ne.s32.totalorder %s109, %s110
      %p119 = scmp.eq.s32.totalorder %s31, 0
      %p120 = por %p118, %p119
      %p121 = scmp.ne.s32.totalorder %s109, %s110
      %p122 = scmp.eq.s32.totalorder %s32, 1
      %p123 = por %p121, %p122
      %p125 = scmp.ne.s32.totalorder %s110, %s124
      %p126 = scmp.eq.s32.totalorder %s32, 0
      %p127 = por %p125, %p126
      %s129 = sadd.s32 %s128, 1
      %p132 = scmp.eq.s32.totalorder %s26, 1
      %p133 = scmp.ne.s32.totalorder %s128, %s130
      %p134 = scmp.eq.s32.totalorder %s26, 0
      %p135 = por %p133, %p134
      %p136 = scmp.ne.s32.totalorder %s128, %s130
      %p137 = scmp.eq.s32.totalorder %s31, 1
      %p138 = por %p136, %p137
      %p139 = scmp.ne.s32.totalorder %s130, %s131
      %p140 = scmp.eq.s32.totalorder %s31, 0
      %p141 = por %p139, %p140
      %p142 = scmp.ne.s32.totalorder %s130, %s131
      %p143 = scmp.eq.s32.totalorder %s32, 1
      %p144 = por %p142, %p143
      %p146 = scmp.ne.s32.totalorder %s131, %s145
      %p147 = scmp.eq.s32.totalorder %s32, 0
      %p148 = por %p146, %p147
      %s149 = ssub.s32 %s26, %s33
      %p150 = scmp.eq.s32.totalorder %s149, 0
      %s152 = sadd.s32 %s151, 1
      %s153 = scalar_select %p150, %s151, %s152
      %p156 = pneg %p150
      %p157 = scmp.eq.s32.totalorder %s26, 1
      %p158 = por %p156, %p157
      %p159 = scmp.ne.s32.totalorder %s151, %s154
      %p160 = scmp.eq.s32.totalorder %s26, 0
      %p161 = por %p159, %p160
      %p162 = scmp.ne.s32.totalorder %s151, %s154
      %p163 = scmp.eq.s32.totalorder %s31, 1
      %p164 = por %p162, %p163
      %p165 = scmp.ne.s32.totalorder %s154, %s155
      %p166 = scmp.eq.s32.totalorder %s31, 0
      %p167 = por %p165, %p166
      %p168 = scmp.ne.s32.totalorder %s154, %s155
      %p169 = scmp.eq.s32.totalorder %s32, 1
      %p170 = por %p168, %p169
      %p172 = scmp.ne.s32.totalorder %s155, %s171
      %p173 = scmp.eq.s32.totalorder %s32, 0
      %p174 = por %p172, %p173
      %s175 = ssub.s32 %s26, %s33
      %p176 = scmp.eq.s32.totalorder %s175, 0
      %s178 = sadd.s32 %s177, 1
      %s179 = scalar_select %p176, %s177, %s178
      %p182 = pneg %p176
      %p183 = scmp.eq.s32.totalorder %s26, 1
      %p184 = por %p182, %p183
      %p185 = scmp.ne.s32.totalorder %s177, %s180
      %p186 = scmp.eq.s32.totalorder %s26, 0
      %p187 = por %p185, %p186
      %p188 = scmp.ne.s32.totalorder %s177, %s180
      %p189 = scmp.eq.s32.totalorder %s31, 1
      %p190 = por %p188, %p189
      %p191 = scmp.ne.s32.totalorder %s180, %s181
      %p192 = scmp.eq.s32.totalorder %s31, 0
      %p193 = por %p191, %p192
      %p194 = scmp.ne.s32.totalorder %s180, %s181
      %p195 = scmp.eq.s32.totalorder %s32, 1
      %p196 = por %p194, %p195
      %p198 = scmp.ne.s32.totalorder %s181, %s197
      %p199 = scmp.eq.s32.totalorder %s32, 0
      %p200 = por %p198, %p199
      %p201 = scmp.le.s32.totalorder 1, %s26
      %p202 = scmp.lt.s32.totalorder %s26, 3
      %p203 = pnand %p201, %p202
      %p204 = pneg %p203
      // Predicated region
      $region9: #{tpu_custom_call.1} parent=5 // pred_check
        _
      $region10: #{tpu_custom_call.1} parent=5 // pred_check_branch
        %206 = sbr.rel (%p203) target = $region12
      $region11: #{tpu_custom_call.1} parent=5 // pred_region
        %s207 = ssub.s32 %s26, 1
        // Predicated region
        $region13: #{tpu_custom_call.1} parent=11 // pred_check
          %p208 = pneg %p99
        $region14: #{tpu_custom_call.1} parent=11 // pred_check_branch
          %210 = sbr.rel (%p208) target = $region16
        $region15: #{tpu_custom_call.1} parent=11 // pred_region
          %s212 = ssub.s32 512, 512
          %213 = vsyncadd [#allocation6], %s212
          %s214 = sshll.u32 [#allocation7], 4
          %s215 = int_to_ptr.vmem [resolvable:$true] %s214
          %220 = dma.hbm_to_vmem [thread:$0]  %s2, 512, %s215, [#allocation6], 128, 128, 8
        $region16: #{tpu_custom_call.1} parent=11 // pred_fallthru
          _
        // Predicated region
        $region17: #{tpu_custom_call.1} parent=11 // pred_check
          %p221 = pneg %p120
        $region18: #{tpu_custom_call.1} parent=11 // pred_check_branch
          %223 = sbr.rel (%p221) target = $region20
        $region19: #{tpu_custom_call.1} parent=11 // pred_region
          %s225 = ssub.s32 512, 512
          %226 = vsyncadd [#allocation9], %s225
          %s227 = sshll.u32 [#allocation8], 4
          %s228 = int_to_ptr.vmem [resolvable:$true] %s227
          %233 = dma.hbm_to_vmem [thread:$0]  %s3, 512, %s228, [#allocation9], 128, 128, 8
        $region20: #{tpu_custom_call.1} parent=11 // pred_fallthru
          _
        // Predicated region
        $region21: #{tpu_custom_call.1} parent=11 // pred_check
          %p234 = pneg %p141
        $region22: #{tpu_custom_call.1} parent=11 // pred_check_branch
          %236 = sbr.rel (%p234) target = $region24
        $region23: #{tpu_custom_call.1} parent=11 // pred_region
          _
        $region24: #{tpu_custom_call.1} parent=11 // pred_fallthru
          _
      $region12: #{tpu_custom_call.1} parent=5 // pred_fallthru
        _
      %p237 = scmp.lt.s32.totalorder %s26, 2
      // Predicated region
      $region25: #{tpu_custom_call.1} parent=5 // pred_check
        %p238 = pneg %p237
      $region26: #{tpu_custom_call.1} parent=5 // pred_check_branch
        %240 = sbr.rel (%p238) target = $region28
      $region27: #{tpu_custom_call.1} parent=5 // pred_region
        // Predicated region
        $region29: #{tpu_custom_call.1} parent=27 // pred_check
          %p241 = pneg %p46
        $region30: #{tpu_custom_call.1} parent=27 // pred_check_branch
          %243 = sbr.rel (%p241) target = $region32
        $region31: #{tpu_custom_call.1} parent=27 // pred_region
          %s244 = sand.u32 %s36, 1
          %s245 = scalar_lea.sflag [#allocation3], %s244
          %s246 = sand.u32 %s36, 1
          %s247 = smul.addr %s246, 8
          %s248 = scalar_lea.vmem [#allocation2], %s247
          %s250 = ssub.s32 128, 128
          %251 = vsyncadd %s245, %s250
          %s252 = smul.addr %s26, 128
          %s253 = scalar_lea.hbm %s0, %s252
          %s255 = sshll.u32 %s248, 4
          %s256 = int_to_ptr.vmem [resolvable:$true] %s255
          %258 = dma.hbm_to_vmem [thread:$0]  %s253, 128, %s256, %s245
        $region32: #{tpu_custom_call.1} parent=27 // pred_fallthru
          _
        // Predicated region
        $region33: #{tpu_custom_call.1} parent=27 // pred_check
          %p259 = pneg %p72
        $region34: #{tpu_custom_call.1} parent=27 // pred_check_branch
          %261 = sbr.rel (%p259) target = $region36
        $region35: #{tpu_custom_call.1} parent=27 // pred_region
          %s262 = sand.u32 %s26, 1
          %s263 = scalar_lea.sflag [#allocation6], %s262
          %s264 = sand.u32 %s62, 1
          %s265 = smul.addr %s264, 4
          %s266 = scalar_lea.vmem [#allocation5], %s265
          %s268 = ssub.s32 64, 64
          %269 = vsyncadd %s263, %s268
          %s270 = smul.addr %s26, 64
          %s271 = scalar_lea.hbm %s1, %s270
          %s273 = sshll.u32 %s266, 4
          %s274 = int_to_ptr.vmem [resolvable:$true] %s273
          %276 = dma.hbm_to_vmem [thread:$0]  %s271, 64, %s274, %s263
        $region36: #{tpu_custom_call.1} parent=27 // pred_fallthru
          _
      $region28: #{tpu_custom_call.1} parent=5 // pred_fallthru
        _
      %p277 = scmp.le.s32.totalorder 1, %s26
      %p278 = scmp.lt.s32.totalorder %s26, 3
      %p279 = pnand %p277, %p278
      %p280 = pneg %p279
      // Predicated region
      $region37: #{tpu_custom_call.1} parent=5 // pred_check
        _
      $region38: #{tpu_custom_call.1} parent=5 // pred_check_branch
        %282 = sbr.rel (%p279) target = $region40
      $region39: #{tpu_custom_call.1} parent=5 // pred_region
        %s283 = ssub.s32 %s26, 1
        %s284 = sand.u32 %s39, 1
        %s285 = scalar_lea.sflag [#allocation3], %s284
        %s286 = sand.u32 %s39, 1
        %s287 = smul.addr %s286, 8
        %s288 = scalar_lea.vmem [#allocation2], %s287
        // Predicated region
        $region41: #{tpu_custom_call.1} parent=39 // pred_check
          %p289 = pneg %p52
        $region42: #{tpu_custom_call.1} parent=39 // pred_check_branch
          %291 = sbr.rel (%p289) target = $region44
        $region43: #{tpu_custom_call.1} parent=39 // pred_region
          %292 = dma.done %s285, 128
        $region44: #{tpu_custom_call.1} parent=39 // pred_fallthru
          _
        %s293 = sand.u32 %s31, 1
        %s294 = scalar_lea.sflag [#allocation6], %s293
        %s295 = sand.u32 %s65, 1
        %s296 = smul.addr %s295, 4
        %s297 = scalar_lea.vmem [#allocation5], %s296
        // Predicated region
        $region45: #{tpu_custom_call.1} parent=39 // pred_check
          %p298 = pneg %p78
        $region46: #{tpu_custom_call.1} parent=39 // pred_check_branch
          %300 = sbr.rel (%p298) target = $region48
        $region47: #{tpu_custom_call.1} parent=39 // pred_region
          %301 = dma.done %s294, 64
        $region48: #{tpu_custom_call.1} parent=39 // pred_fallthru
          _
        // Predicated region
        $region49: #{tpu_custom_call.1} parent=39 // pred_check
          %p302 = pneg %p99
        $region50: #{tpu_custom_call.1} parent=39 // pred_check_branch
          %304 = sbr.rel (%p302) target = $region52
        $region51: #{tpu_custom_call.1} parent=39 // pred_region
          %305 = dma.done [#allocation6], 512
        $region52: #{tpu_custom_call.1} parent=39 // pred_fallthru
          _
        // Predicated region
        $region53: #{tpu_custom_call.1} parent=39 // pred_check
          %p306 = pneg %p120
        $region54: #{tpu_custom_call.1} parent=39 // pred_check_branch
          %308 = sbr.rel (%p306) target = $region56
        $region55: #{tpu_custom_call.1} parent=39 // pred_region
          %309 = dma.done [#allocation9], 512
        $region56: #{tpu_custom_call.1} parent=39 // pred_fallthru
          _
        %s310 = sand.u32 %s39, 1
        %s311 = scalar_lea.sflag [#allocation3], %s310
        %s312 = sand.u32 %s39, 1
        %s313 = smul.addr %s312, 8
        %s314 = scalar_lea.vmem [#allocation2], %s313
        %p315 = pneg %p52
        %p316 = pneg %p49
        %s317 = sand.u32 %s31, 1
        %s318 = scalar_lea.sflag [#allocation6], %s317
        %s319 = sand.u32 %s65, 1
        %s320 = smul.addr %s319, 4
        %s321 = scalar_lea.vmem [#allocation5], %s320
        %p322 = pneg %p78
        %p323 = pneg %p75
        %p324 = pneg %p99
        %p325 = pneg %p96
        %p326 = pneg %p120
        %p327 = pneg %p117
        %p328 = pneg %p141
        %p329 = pneg %p138
        %p330 = pneg %p167
        %p331 = pneg %p164
        %s332 = sand.u32 %s154, 1
        %s333 = scalar_lea.sflag [#allocation4], %s332
        %s334 = sand.u32 %s154, 1
        %s335 = smul.addr %s334, 8
        %s336 = scalar_lea.vmem [#allocation10], %s335
        %p337 = pneg %p193
        %p338 = pneg %p190
        %s339 = sand.u32 %s180, 1
        %s340 = scalar_lea.sflag [#allocation12], %s339
        %s341 = sand.u32 %s180, 1
        %s342 = smul.addr %s341, 8
        %s343 = scalar_lea.vmem [#allocation11], %s342
        %v344 = vld [vmem:[%s288] sm:$0xff]
        %v345 = vld [vmem:[%s297] sm:$0xf]
        %v346 = vunpack.c.l.bf16 %v345
        %vm347 = vcmask 64512
        %v348 = vsel %vm347, %v346, 0.0
        %349 = vadd.xlane.f32.xlu0 %v348
        %v350 = vpop.xlane.xlu0 %349
        %v351 = vmax.f32 %v350, 1.0
        %v352 = vrcp.pop %v351
        %v354 = vsel %vm347, %v346, 0
        %356 = vmatprep.subr.mxu0 0.0
        %357 = vmatpush1.msra.mxu0 0.0
        %358 = vmatprep.subr.mxu0 0.0
        %359 = vmatpush1.msra.mxu0 0.0
        %360 = vmatprep.subr.mxu0 0.0
        %361 = vmatpush1.msra.mxu0 0.0
        %362 = vmatprep.subr.mxu0 0.0
        %363 = vmatpush1.msra.mxu0 0.0
        %364 = vmatprep.subr.mxu0 0.0
        %365 = vmatpush1.msra.mxu0 0.0
        %366 = vmatprep.subr.mxu0 0.0
        %367 = vmatpush1.msra.mxu0 0.0
        %368 = vmatprep.subr.mxu0 0.0
        %369 = vmatpush1.msra.mxu0 0.0
        %370 = vmatprep.subr.mxu0 0.0
        %371 = vmatpush1.msra.mxu0 0.0
        %372 = vmatprep.subr.mxu0 0.0
        %373 = vmatpush1.msra.mxu0 0.0
        %374 = vmatprep.subr.mxu0 0.0
        %375 = vmatpush1.msra.mxu0 0.0
        %376 = vmatprep.subr.mxu0 0.0
        %377 = vmatpush1.msra.mxu0 0.0
        %378 = vmatprep.subr.mxu0 0.0
        %379 = vmatpush1.msra.mxu0 0.0
        %380 = vmatprep.subr.mxu0 0.0
        %381 = vmatpush1.msra.mxu0 0.0
        %382 = vmatprep.subr.mxu0 0.0
        %383 = vmatpush1.msra.mxu0 0.0
        %384 = vmatprep.subr.mxu0 0.0
        %385 = vmatpush1.msra.mxu0 0.0
        %386 = vmatprep.subr.mxu0 0.0
        %387 = vmatpush1.msra.mxu0 %v344
        %388 = vmatprep.subr.mxu0 0.0
        %389 = vmatpush2.msra.mxu0 0.0
        %390 = vmatprep.subr.mxu0 0.0
        %391 = vmatpush2.msra.mxu0 0.0
        %392 = vmatprep.subr.mxu0 0.0
        %393 = vmatpush2.msra.mxu0 0.0
        %394 = vmatprep.subr.mxu0 0.0
        %395 = vmatpush2.msra.mxu0 0.0
        %396 = vmatprep.subr.mxu0 0.0
        %397 = vmatpush2.msra.mxu0 0.0
        %398 = vmatprep.subr.mxu0 0.0
        %399 = vmatpush2.msra.mxu0 0.0
        %400 = vmatprep.subr.mxu0 0.0
        %401 = vmatpush2.msra.mxu0 0.0
        %402 = vmatprep.subr.mxu0 0.0
        %403 = vmatpush2.msra.mxu0 0.0
        %404 = vmatprep.subr.mxu0 0.0
        %405 = vmatpush2.msra.mxu0 0.0
        %406 = vmatprep.subr.mxu0 0.0
        %407 = vmatpush2.msra.mxu0 0.0
        %408 = vmatprep.subr.mxu0 0.0
        %409 = vmatpush2.msra.mxu0 0.0
        %410 = vmatprep.subr.mxu0 0.0
        %411 = vmatpush2.msra.mxu0 0.0
        %412 = vmatprep.subr.mxu0 0.0
        %413 = vmatpush2.msra.mxu0 0.0
        %414 = vmatprep.subr.mxu0 0.0
        %415 = vmatpush2.msra.mxu0 0.0
        %416 = vmatprep.subr.mxu0 0.0
        %417 = vmatpush2.msra.mxu0 0.0
        %418 = vmatprep.subr.mxu0 0.0
        %419 = vmatpush2.msra.mxu0 0.0
        %420 = vmatprep.mubr.f32.mxu0 0.0
        %421 = vmatmul.mubr.f32.gmra.mxu0 %v354
        %v422 = vpop.f32.mrf.mxu0
        %v423 = vadd.f32 0.0, %v422
        %v424 = vpop.f32.mrf.mxu0
        %425 = vdwg.mxu0
        %v426 = vmul.f32 %v352, %v423
        %v427 = vld [vmem:[#allocation7] sm:$0xff]
        %v428 = vld [vmem:[#allocation7 + $0x8] sm:$0xff]
        %v429 = vld [vmem:[#allocation7 + $0x10] sm:$0xff]
        %v430 = vld [vmem:[#allocation7 + $0x18] sm:$0xff]
        %v431 = vld [vmem:[#allocation8] sm:$0xff]
        %v432 = vld [vmem:[#allocation8 + $0x8] sm:$0xff]
        %v433 = vld [vmem:[#allocation8 + $0x10] sm:$0xff]
        %v434 = vld [vmem:[#allocation8 + $0x18] sm:$0xff]
        %vm435 = vcmask 261120
        %v437 = vsel %vm435, %v426, 0
        %439 = vmatprep.subr.mxu0 0.0
        %440 = vmatpush1.msra.mxu0 0.0
        %441 = vmatprep.subr.mxu0 0.0
        %442 = vmatpush1.msra.mxu0 0.0
        %443 = vmatprep.subr.mxu0 0.0
        %444 = vmatpush1.msra.mxu0 0.0
        %445 = vmatprep.subr.mxu0 0.0
        %446 = vmatpush1.msra.mxu0 0.0
        %447 = vmatprep.subr.mxu0 0.0
        %448 = vmatpush1.msra.mxu0 0.0
        %449 = vmatprep.subr.mxu0 0.0
        %450 = vmatpush1.msra.mxu0 0.0
        %451 = vmatprep.subr.mxu0 0.0
        %452 = vmatpush1.msra.mxu0 0.0
        %453 = vmatprep.subr.mxu0 0.0
        %454 = vmatpush1.msra.mxu0 0.0
        %455 = vmatprep.subr.mxu0 0.0
        %456 = vmatpush1.msra.mxu0 0.0
        %457 = vmatprep.subr.mxu0 0.0
        %458 = vmatpush1.msra.mxu0 0.0
        %459 = vmatprep.subr.mxu0 0.0
        %460 = vmatpush1.msra.mxu0 0.0
        %461 = vmatprep.subr.mxu0 0.0
        %462 = vmatpush1.msra.mxu0 0.0
        %463 = vmatprep.subr.mxu0 0.0
        %464 = vmatpush1.msra.mxu0 %v434
        %465 = vmatprep.subr.mxu0 0.0
        %466 = vmatpush1.msra.mxu0 %v433
        %467 = vmatprep.subr.mxu0 0.0
        %468 = vmatpush1.msra.mxu0 %v432
        %469 = vmatprep.subr.mxu0 0.0
        %470 = vmatpush1.msra.mxu0 %v431
        %471 = vmatprep.subr.mxu0 0.0
        %472 = vmatpush2.msra.mxu0 0.0
        %473 = vmatprep.subr.mxu0 0.0
        %474 = vmatpush2.msra.mxu0 0.0
        %475 = vmatprep.subr.mxu0 0.0
        %476 = vmatpush2.msra.mxu0 0.0
        %477 = vmatprep.subr.mxu0 0.0
        %478 = vmatpush2.msra.mxu0 0.0
        %479 = vmatprep.subr.mxu0 0.0
        %480 = vmatpush2.msra.mxu0 0.0
        %481 = vmatprep.subr.mxu0 0.0
        %482 = vmatpush2.msra.mxu0 0.0
        %483 = vmatprep.subr.mxu0 0.0
        %484 = vmatpush2.msra.mxu0 0.0
        %485 = vmatprep.subr.mxu0 0.0
        %486 = vmatpush2.msra.mxu0 0.0
        %487 = vmatprep.subr.mxu0 0.0
        %488 = vmatpush2.msra.mxu0 0.0
        %489 = vmatprep.subr.mxu0 0.0
        %490 = vmatpush2.msra.mxu0 0.0
        %491 = vmatprep.subr.mxu0 0.0
        %492 = vmatpush2.msra.mxu0 0.0
        %493 = vmatprep.subr.mxu0 0.0
        %494 = vmatpush2.msra.mxu0 0.0
        %495 = vmatprep.subr.mxu0 0.0
        %496 = vmatpush2.msra.mxu0 0.0
        %497 = vmatprep.subr.mxu0 0.0
        %498 = vmatpush2.msra.mxu0 0.0
        %499 = vmatprep.subr.mxu0 0.0
        %500 = vmatpush2.msra.mxu0 0.0
        %501 = vmatprep.subr.mxu0 0.0
        %502 = vmatpush2.msra.mxu0 0.0
        %503 = vmatprep.mubr.f32.mxu0 0.0
        %504 = vmatmul.mubr.f32.gmra.mxu0 %v437
        %v505 = vpop.f32.mrf.mxu0
        %v506 = vadd.f32 0.0, %v505
        %v507 = vpop.f32.mrf.mxu0
        %508 = vdwg.mxu0
        %v510 = vsel %vm435, %v344, 0
        %512 = vmatprep.subr.mxu0 0.0
        %513 = vmatpush1.msra.mxu0 0.0
        %514 = vmatprep.subr.mxu0 0.0
        %515 = vmatpush1.msra.mxu0 0.0
        %516 = vmatprep.subr.mxu0 0.0
        %517 = vmatpush1.msra.mxu0 0.0
        %518 = vmatprep.subr.mxu0 0.0
        %519 = vmatpush1.msra.mxu0 0.0
        %520 = vmatprep.subr.mxu0 0.0
        %521 = vmatpush1.msra.mxu0 0.0
        %522 = vmatprep.subr.mxu0 0.0
        %523 = vmatpush1.msra.mxu0 0.0
        %524 = vmatprep.subr.mxu0 0.0
        %525 = vmatpush1.msra.mxu0 0.0
        %526 = vmatprep.subr.mxu0 0.0
        %527 = vmatpush1.msra.mxu0 0.0
        %528 = vmatprep.subr.mxu0 0.0
        %529 = vmatpush1.msra.mxu0 0.0
        %530 = vmatprep.subr.mxu0 0.0
        %531 = vmatpush1.msra.mxu0 0.0
        %532 = vmatprep.subr.mxu0 0.0
        %533 = vmatpush1.msra.mxu0 0.0
        %534 = vmatprep.subr.mxu0 0.0
        %535 = vmatpush1.msra.mxu0 0.0
        %536 = vmatprep.subr.mxu0 0.0
        %537 = vmatpush1.msra.mxu0 %v430
        %538 = vmatprep.subr.mxu0 0.0
        %539 = vmatpush1.msra.mxu0 %v429
        %540 = vmatprep.subr.mxu0 0.0
        %541 = vmatpush1.msra.mxu0 %v428
        %542 = vmatprep.subr.mxu0 0.0
        %543 = vmatpush1.msra.mxu0 %v427
        %544 = vmatprep.subr.mxu0 0.0
        %545 = vmatpush2.msra.mxu0 0.0
        %546 = vmatprep.subr.mxu0 0.0
        %547 = vmatpush2.msra.mxu0 0.0
        %548 = vmatprep.subr.mxu0 0.0
        %549 = vmatpush2.msra.mxu0 0.0
        %550 = vmatprep.subr.mxu0 0.0
        %551 = vmatpush2.msra.mxu0 0.0
        %552 = vmatprep.subr.mxu0 0.0
        %553 = vmatpush2.msra.mxu0 0.0
        %554 = vmatprep.subr.mxu0 0.0
        %555 = vmatpush2.msra.mxu0 0.0
        %556 = vmatprep.subr.mxu0 0.0
        %557 = vmatpush2.msra.mxu0 0.0
        %558 = vmatprep.subr.mxu0 0.0
        %559 = vmatpush2.msra.mxu0 0.0
        %560 = vmatprep.subr.mxu0 0.0
        %561 = vmatpush2.msra.mxu0 0.0
        %562 = vmatprep.subr.mxu0 0.0
        %563 = vmatpush2.msra.mxu0 0.0
        %564 = vmatprep.subr.mxu0 0.0
        %565 = vmatpush2.msra.mxu0 0.0
        %566 = vmatprep.subr.mxu0 0.0
        %567 = vmatpush2.msra.mxu0 0.0
        %568 = vmatprep.subr.mxu0 0.0
        %569 = vmatpush2.msra.mxu0 0.0
        %570 = vmatprep.subr.mxu0 0.0
        %571 = vmatpush2.msra.mxu0 0.0
        %572 = vmatprep.subr.mxu0 0.0
        %573 = vmatpush2.msra.mxu0 0.0
        %574 = vmatprep.subr.mxu0 0.0
        %575 = vmatpush2.msra.mxu0 0.0
        %576 = vmatprep.mubr.f32.mxu0 0.0
        %577 = vmatmul.mubr.f32.gmra.mxu0 %v510
        %v578 = vpop.f32.mrf.mxu0
        %v579 = vadd.f32 %v506, %v578
        %v580 = vpop.f32.mrf.mxu0
        %581 = vdwg.mxu0
        %v582 = vld [vmem:[%s4] sm:$0x1]
        %v584 = vlaneseq
        %v585 = vshrl.u32 %v584, 7
        %v586 = vsub.s32 0, %v585
        %v587 = vrot.slane %v582, %v586
        %v589 = vadd.f32 %v579, %v587
        %v590 = vmul.f32 %v589, %v589
        %v591 = vsel %vm435, %v590, 0.0
        %592 = vadd.xlane.f32.xlu0 %v591
        %v593 = vpop.xlane.xlu0 %592
        %v594 = vmax.f32 %v593, 1e-24
        %v595 = vrsqrt.pop %v594
        %v596 = vmul.f32 %v589, %v595
        %v597 = vmax.f32 %v596, 0.0
        %599 = vrot.lane.b32.xlu0 %v590, 96
        %v600 = vpop.permute.xlu0 %599
        %v602 = vsel %vm347, %v600, 0.0
        %603 = vadd.xlane.f32.xlu0 %v602
        %v604 = vpop.xlane.xlu0 %603
        %v605 = vmax.f32 %v604, 1e-24
        %v606 = vrsqrt.pop %v605
        %v607 = vmul.f32 %v589, %v606
        %v608 = vmax.f32 %v607, 0.0
        %vm609 = vcmask 326912
        %v610 = vsel %vm609, %v608, -inf
        %611 = vmax.xlane.f32.xlu0 %v610
        %v612 = vpop.xlane.xlu0 %611
        %v613 = vsub.f32 %v608, %v612
        %v614 = vmul.f32 %v613, 1.442695
        %v615 = vpow.pop %v614
        %617 = vrot.lane.b32.xlu0 %v615, 96
        %v618 = vpop.permute.xlu0 %617
        %v620 = vsel %vm347, %v618, 0.0
        %621 = vadd.xlane.f32.xlu0 %v620
        %v622 = vpop.xlane.xlu0 %621
        %v623 = vrcp.pop %v622
        %v624 = vmul.f32 %v615, %v623
        %626 = vrot.lane.b32.xlu0 %v624, 96
        %v627 = vpop.permute.xlu0 %626
        %629 = vmatprep.subr.mxu0 0.0
        %630 = vmatpush1.msra.mxu0 0.0
        %631 = vmatprep.subr.mxu0 0.0
        %632 = vmatpush1.msra.mxu0 0.0
        %633 = vmatprep.subr.mxu0 0.0
        %634 = vmatpush1.msra.mxu0 0.0
        %635 = vmatprep.subr.mxu0 0.0
        %636 = vmatpush1.msra.mxu0 0.0
        %637 = vmatprep.subr.mxu0 0.0
        %638 = vmatpush1.msra.mxu0 0.0
        %639 = vmatprep.subr.mxu0 0.0
        %640 = vmatpush1.msra.mxu0 0.0
        %641 = vmatprep.subr.mxu0 0.0
        %642 = vmatpush1.msra.mxu0 0.0
        %643 = vmatprep.subr.mxu0 0.0
        %644 = vmatpush1.msra.mxu0 0.0
        %645 = vmatprep.subr.mxu0 0.0
        %646 = vmatpush1.msra.mxu0 0.0
        %647 = vmatprep.subr.mxu0 0.0
        %648 = vmatpush1.msra.mxu0 0.0
        %649 = vmatprep.subr.mxu0 0.0
        %650 = vmatpush1.msra.mxu0 0.0
        %651 = vmatprep.subr.mxu0 0.0
        %652 = vmatpush1.msra.mxu0 0.0
        %653 = vmatprep.subr.mxu0 0.0
        %654 = vmatpush1.msra.mxu0 0.0
        %655 = vmatprep.subr.mxu0 0.0
        %656 = vmatpush1.msra.mxu0 0.0
        %657 = vmatprep.subr.mxu0 0.0
        %658 = vmatpush1.msra.mxu0 0.0
        %659 = vmatprep.subr.mxu0 0.0
        %660 = vmatpush1.msra.mxu0 %v627
        %661 = vmatprep.subr.mxu0 0.0
        %662 = vmatpush2.msra.mxu0 0.0
        %663 = vmatprep.subr.mxu0 0.0
        %664 = vmatpush2.msra.mxu0 0.0
        %665 = vmatprep.subr.mxu0 0.0
        %666 = vmatpush2.msra.mxu0 0.0
        %667 = vmatprep.subr.mxu0 0.0
        %668 = vmatpush2.msra.mxu0 0.0
        %669 = vmatprep.subr.mxu0 0.0
        %670 = vmatpush2.msra.mxu0 0.0
        %671 = vmatprep.subr.mxu0 0.0
        %672 = vmatpush2.msra.mxu0 0.0
        %673 = vmatprep.subr.mxu0 0.0
        %674 = vmatpush2.msra.mxu0 0.0
        %675 = vmatprep.subr.mxu0 0.0
        %676 = vmatpush2.msra.mxu0 0.0
        %677 = vmatprep.subr.mxu0 0.0
        %678 = vmatpush2.msra.mxu0 0.0
        %679 = vmatprep.subr.mxu0 0.0
        %680 = vmatpush2.msra.mxu0 0.0
        %681 = vmatprep.subr.mxu0 0.0
        %682 = vmatpush2.msra.mxu0 0.0
        %683 = vmatprep.subr.mxu0 0.0
        %684 = vmatpush2.msra.mxu0 0.0
        %685 = vmatprep.subr.mxu0 0.0
        %686 = vmatpush2.msra.mxu0 0.0
        %687 = vmatprep.subr.mxu0 0.0
        %688 = vmatpush2.msra.mxu0 0.0
        %689 = vmatprep.subr.mxu0 0.0
        %690 = vmatpush2.msra.mxu0 0.0
        %691 = vmatprep.subr.mxu0 0.0
        %692 = vmatpush2.msra.mxu0 0.0
        %693 = vmatprep.mubr.f32.mxu0 0.0
        %694 = vmatmul.mubr.f32.gmra.mxu0 %v354
        %v695 = vpop.f32.mrf.mxu0
        %v696 = vadd.f32 0.0, %v695
        %v697 = vpop.f32.mrf.mxu0
        %698 = vdwg.mxu0
        %699 = vxpose.xlu0.b32.start [1/16] %v627, 128
        %700 = vxpose.xlu0.b32.cont [2/16] 0.0, 128
        %701 = vxpose.xlu0.b32.cont [3/16] 0.0, 128
        %702 = vxpose.xlu0.b32.cont [4/16] 0.0, 128
        %703 = vxpose.xlu0.b32.cont [5/16] 0.0, 128
        %704 = vxpose.xlu0.b32.cont [6/16] 0.0, 128
        %705 = vxpose.xlu0.b32.cont [7/16] 0.0, 128
        %706 = vxpose.xlu0.b32.cont [8/16] 0.0, 128
        %707 = vxpose.xlu0.b32.cont [9/16] 0.0, 128
        %708 = vxpose.xlu0.b32.cont [10/16] 0.0, 128
        %709 = vxpose.xlu0.b32.cont [11/16] 0.0, 128
        %710 = vxpose.xlu0.b32.cont [12/16] 0.0, 128
        %711 = vxpose.xlu0.b32.cont [13/16] 0.0, 128
        %712 = vxpose.xlu0.b32.cont [14/16] 0.0, 128
        %713 = vxpose.xlu0.b32.cont [15/16] 0.0, 128
        %714 = vxpose.xlu0.b32.end [16/16] 0.0, 128
        %v715 = vpop.trf.xlu0
        %v716 = vpop.trf.xlu0
        %v717 = vpop.trf.xlu0
        %v718 = vpop.trf.xlu0
        %v719 = vpop.trf.xlu0
        %v720 = vpop.trf.xlu0
        %v721 = vpop.trf.xlu0
        %v722 = vpop.trf.xlu0
        %v723 = vpop.trf.xlu0
        %v724 = vpop.trf.xlu0
        %v725 = vpop.trf.xlu0
        %v726 = vpop.trf.xlu0
        %v727 = vpop.trf.xlu0
        %v728 = vpop.trf.xlu0
        %v729 = vpop.trf.xlu0
        %v730 = vpop.trf.xlu0
        %v732 = vsel %vm347, %v715, 0
        %734 = vmatprep.subr.mxu0 0.0
        %735 = vmatpush1.msra.mxu0 0.0
        %736 = vmatprep.subr.mxu0 0.0
        %737 = vmatpush1.msra.mxu0 0.0
        %738 = vmatprep.subr.mxu0 0.0
        %739 = vmatpush1.msra.mxu0 0.0
        %740 = vmatprep.subr.mxu0 0.0
        %741 = vmatpush1.msra.mxu0 0.0
        %742 = vmatprep.subr.mxu0 0.0
        %743 = vmatpush1.msra.mxu0 0.0
        %744 = vmatprep.subr.mxu0 0.0
        %745 = vmatpush1.msra.mxu0 0.0
        %746 = vmatprep.subr.mxu0 0.0
        %747 = vmatpush1.msra.mxu0 0.0
        %748 = vmatprep.subr.mxu0 0.0
        %749 = vmatpush1.msra.mxu0 0.0
        %750 = vmatprep.subr.mxu0 0.0
        %751 = vmatpush1.msra.mxu0 0.0
        %752 = vmatprep.subr.mxu0 0.0
        %753 = vmatpush1.msra.mxu0 0.0
        %754 = vmatprep.subr.mxu0 0.0
        %755 = vmatpush1.msra.mxu0 0.0
        %756 = vmatprep.subr.mxu0 0.0
        %757 = vmatpush1.msra.mxu0 0.0
        %758 = vmatprep.subr.mxu0 0.0
        %759 = vmatpush1.msra.mxu0 0.0
        %760 = vmatprep.subr.mxu0 0.0
        %761 = vmatpush1.msra.mxu0 0.0
        %762 = vmatprep.subr.mxu0 0.0
        %763 = vmatpush1.msra.mxu0 0.0
        %764 = vmatprep.subr.mxu0 0.0
        %765 = vmatpush1.msra.mxu0 %v696
        %766 = vmatprep.subr.mxu0 0.0
        %767 = vmatpush2.msra.mxu0 0.0
        %768 = vmatprep.subr.mxu0 0.0
        %769 = vmatpush2.msra.mxu0 0.0
        %770 = vmatprep.subr.mxu0 0.0
        %771 = vmatpush2.msra.mxu0 0.0
        %772 = vmatprep.subr.mxu0 0.0
        %773 = vmatpush2.msra.mxu0 0.0
        %774 = vmatprep.subr.mxu0 0.0
        %775 = vmatpush2.msra.mxu0 0.0
        %776 = vmatprep.subr.mxu0 0.0
        %777 = vmatpush2.msra.mxu0 0.0
        %778 = vmatprep.subr.mxu0 0.0
        %779 = vmatpush2.msra.mxu0 0.0
        %780 = vmatprep.subr.mxu0 0.0
        %781 = vmatpush2.msra.mxu0 0.0
        %782 = vmatprep.subr.mxu0 0.0
        %783 = vmatpush2.msra.mxu0 0.0
        %784 = vmatprep.subr.mxu0 0.0
        %785 = vmatpush2.msra.mxu0 0.0
        %786 = vmatprep.subr.mxu0 0.0
        %787 = vmatpush2.msra.mxu0 0.0
        %788 = vmatprep.subr.mxu0 0.0
        %789 = vmatpush2.msra.mxu0 0.0
        %790 = vmatprep.subr.mxu0 0.0
        %791 = vmatpush2.msra.mxu0 0.0
        %792 = vmatprep.subr.mxu0 0.0
        %793 = vmatpush2.msra.mxu0 0.0
        %794 = vmatprep.subr.mxu0 0.0
        %795 = vmatpush2.msra.mxu0 0.0
        %796 = vmatprep.subr.mxu0 0.0
        %797 = vmatpush2.msra.mxu0 0.0
        %798 = vmatprep.mubr.f32.mxu0 0.0
        %799 = vmatmul.mubr.f32.gmra.mxu0 %v732
        %v800 = vpop.f32.mrf.mxu0
        %v801 = vadd.f32 0.0, %v800
        %v802 = vpop.f32.mrf.mxu0
        %803 = vdwg.mxu0
        %804 = vst.msk [vmem:[%s336] sm:$0xff] %vm347, %v801
        %805 = vmatprep.subr.mxu0 0.0
        %806 = vmatpush1.msra.mxu0 0.0
        %807 = vmatprep.subr.mxu0 0.0
        %808 = vmatpush1.msra.mxu0 0.0
        %809 = vmatprep.subr.mxu0 0.0
        %810 = vmatpush1.msra.mxu0 0.0
        %811 = vmatprep.subr.mxu0 0.0
        %812 = vmatpush1.msra.mxu0 0.0
        %813 = vmatprep.subr.mxu0 0.0
        %814 = vmatpush1.msra.mxu0 0.0
        %815 = vmatprep.subr.mxu0 0.0
        %816 = vmatpush1.msra.mxu0 0.0
        %817 = vmatprep.subr.mxu0 0.0
        %818 = vmatpush1.msra.mxu0 0.0
        %819 = vmatprep.subr.mxu0 0.0
        %820 = vmatpush1.msra.mxu0 0.0
        %821 = vmatprep.subr.mxu0 0.0
        %822 = vmatpush1.msra.mxu0 0.0
        %823 = vmatprep.subr.mxu0 0.0
        %824 = vmatpush1.msra.mxu0 0.0
        %825 = vmatprep.subr.mxu0 0.0
        %826 = vmatpush1.msra.mxu0 0.0
        %827 = vmatprep.subr.mxu0 0.0
        %828 = vmatpush1.msra.mxu0 0.0
        %829 = vmatprep.subr.mxu0 0.0
        %830 = vmatpush1.msra.mxu0 0.0
        %831 = vmatprep.subr.mxu0 0.0
        %832 = vmatpush1.msra.mxu0 0.0
        %833 = vmatprep.subr.mxu0 0.0
        %834 = vmatpush1.msra.mxu0 0.0
        %835 = vmatprep.subr.mxu0 0.0
        %836 = vmatpush1.msra.mxu0 %v597
        %837 = vmatprep.subr.mxu0 0.0
        %838 = vmatpush2.msra.mxu0 0.0
        %839 = vmatprep.subr.mxu0 0.0
        %840 = vmatpush2.msra.mxu0 0.0
        %841 = vmatprep.subr.mxu0 0.0
        %842 = vmatpush2.msra.mxu0 0.0
        %843 = vmatprep.subr.mxu0 0.0
        %844 = vmatpush2.msra.mxu0 0.0
        %845 = vmatprep.subr.mxu0 0.0
        %846 = vmatpush2.msra.mxu0 0.0
        %847 = vmatprep.subr.mxu0 0.0
        %848 = vmatpush2.msra.mxu0 0.0
        %849 = vmatprep.subr.mxu0 0.0
        %850 = vmatpush2.msra.mxu0 0.0
        %851 = vmatprep.subr.mxu0 0.0
        %852 = vmatpush2.msra.mxu0 0.0
        %853 = vmatprep.subr.mxu0 0.0
        %854 = vmatpush2.msra.mxu0 0.0
        %855 = vmatprep.subr.mxu0 0.0
        %856 = vmatpush2.msra.mxu0 0.0
        %857 = vmatprep.subr.mxu0 0.0
        %858 = vmatpush2.msra.mxu0 0.0
        %859 = vmatprep.subr.mxu0 0.0
        %860 = vmatpush2.msra.mxu0 0.0
        %861 = vmatprep.subr.mxu0 0.0
        %862 = vmatpush2.msra.mxu0 0.0
        %863 = vmatprep.subr.mxu0 0.0
        %864 = vmatpush2.msra.mxu0 0.0
        %865 = vmatprep.subr.mxu0 0.0
        %866 = vmatpush2.msra.mxu0 0.0
        %867 = vmatprep.subr.mxu0 0.0
        %868 = vmatpush2.msra.mxu0 0.0
        %869 = vmatprep.mubr.f32.mxu0 0.0
        %870 = vmatmul.mubr.f32.gmra.mxu0 %v732
        %v871 = vpop.f32.mrf.mxu0
        %v872 = vadd.f32 0.0, %v871
        %v873 = vpop.f32.mrf.mxu0
        %874 = vdwg.mxu0
        %875 = vst.msk [vmem:[%s343] sm:$0xff] %vm435, %v872
        %s876 = sand.u32 %s154, 1
        %s877 = scalar_lea.sflag [#allocation4], %s876
        %s878 = sand.u32 %s154, 1
        %s879 = smul.addr %s878, 8
        %s880 = scalar_lea.vmem [#allocation10], %s879
        %s881 = sand.u32 %s180, 1
        %s882 = scalar_lea.sflag [#allocation12], %s881
        %s883 = sand.u32 %s180, 1
        %s884 = smul.addr %s883, 8
        %s885 = scalar_lea.vmem [#allocation11], %s884
        // Predicated region
        $region57: #{tpu_custom_call.1} parent=39 // pred_check
          %p886 = pneg %p164
        $region58: #{tpu_custom_call.1} parent=39 // pred_check_branch
          %888 = sbr.rel (%p886) target = $region60
        $region59: #{tpu_custom_call.1} parent=39 // pred_region
          %s890 = ssub.s32 128, 128
          %891 = vsyncadd %s877, %s890
          %s892 = smul.addr %s31, 128
          %s893 = scalar_lea.hbm %s5, %s892
          %s895 = sshll.u32 %s880, 4
          %s896 = int_to_ptr.vmem [resolvable:$true] %s895
          %898 = dma.vmem_to_hbm [thread:$0]  %s896, 128, %s893, %s877
        $region60: #{tpu_custom_call.1} parent=39 // pred_fallthru
          _
        // Predicated region
        $region61: #{tpu_custom_call.1} parent=39 // pred_check
          %p899 = pneg %p190
        $region62: #{tpu_custom_call.1} parent=39 // pred_check_branch
          %901 = sbr.rel (%p899) target = $region64
        $region63: #{tpu_custom_call.1} parent=39 // pred_region
          %s903 = ssub.s32 128, 128
          %904 = vsyncadd %s882, %s903
          %s905 = smul.addr %s31, 128
          %s906 = scalar_lea.hbm %s6, %s905
          %s908 = sshll.u32 %s885, 4
          %s909 = int_to_ptr.vmem [resolvable:$true] %s908
          %911 = dma.vmem_to_hbm [thread:$0]  %s909, 128, %s906, %s882
        $region64: #{tpu_custom_call.1} parent=39 // pred_fallthru
          _
      $region40: #{tpu_custom_call.1} parent=5 // pred_fallthru
        _
      %p912 = scmp.le.s32.totalorder 2, %s26
      // Predicated region
      $region65: #{tpu_custom_call.1} parent=5 // pred_check
        %p913 = pneg %p912
      $region66: #{tpu_custom_call.1} parent=5 // pred_check_branch
        %915 = sbr.rel (%p913) target = $region68
      $region67: #{tpu_custom_call.1} parent=5 // pred_region
        %s916 = ssub.s32 %s26, 2
        // Predicated region
        $region69: #{tpu_custom_call.1} parent=67 // pred_check
          %p917 = pneg %p170
        $region70: #{tpu_custom_call.1} parent=67 // pred_check_branch
          %919 = sbr.rel (%p917) target = $region72
        $region71: #{tpu_custom_call.1} parent=67 // pred_region
          %s920 = sand.u32 %s155, 1
          %s921 = scalar_lea.sflag [#allocation4], %s920
          %s922 = sand.u32 %s155, 1
          %s923 = smul.addr %s922, 8
          %s924 = scalar_lea.vmem [#allocation10], %s923
          %925 = dma.done %s921, 128
        $region72: #{tpu_custom_call.1} parent=67 // pred_fallthru
          _
        // Predicated region
        $region73: #{tpu_custom_call.1} parent=67 // pred_check
          %p926 = pneg %p196
        $region74: #{tpu_custom_call.1} parent=67 // pred_check_branch
          %928 = sbr.rel (%p926) target = $region76
        $region75: #{tpu_custom_call.1} parent=67 // pred_region
          %s929 = sand.u32 %s181, 1
          %s930 = scalar_lea.sflag [#allocation12], %s929
          %s931 = sand.u32 %s181, 1
          %s932 = smul.addr %s931, 8
          %s933 = scalar_lea.vmem [#allocation11], %s932
          %934 = dma.done %s930, 128
        $region76: #{tpu_custom_call.1} parent=67 // pred_fallthru
          _
      $region68: #{tpu_custom_call.1} parent=5 // pred_fallthru
        _
    $region6: #{tpu_custom_call.1} parent=1 // loop_footer
      %s30 = sadd.s32 1, %s26
    $region7: #{tpu_custom_call.1} parent=1 // loop_footer_branch
      %25 = sbr.rel target = $region3
    $region8: #{tpu_custom_call.1} parent=1 // loop_exit
      _
    %935 = vsyncpa [#allocation3], 1
    %s936 = scalar_lea.sflag [#allocation3], 1
    %937 = vsyncpa %s936, 1
    %938 = vsyncpa [#allocation6], 1
    %s939 = scalar_lea.sflag [#allocation6], 1
    %940 = vsyncpa %s939, 1
    %941 = vsyncpa [#allocation9], 1
    %942 = vsyncpa [#allocation4], 1
    %s943 = scalar_lea.sflag [#allocation4], 1
    %944 = vsyncpa %s943, 1
    %945 = vsyncpa [#allocation12], 1
    %s946 = scalar_lea.sflag [#allocation12], 1
    %947 = vsyncpa %s946, 1

</llo_original>
